<compile_context>
chip_gen: v7x
topology: tpu7x:2x2x1
jax: 0.10.0
libtpu: 0.0.40
codegen_flags: <defaults>
</compile_context>

<pallas_src>
import functools

import jax
import jax.numpy as jnp
from jax.experimental import pallas as pl
from jax.experimental.pallas import tpu as pltpu

LANE = 128
SUBLANE = 8


def _dice_partials_kernel(fuse_softmax, mask_padding, s_ref, t_ref, out_ref):
    """One grid step == one (batch, row-tile) block, all classes.

    s_ref:   VMEM (C, R, 128) f32  per-class scores (logits if fuse_softmax)
    t_ref:   VMEM (R, 128)    i32  class-id map (-1 on padded elements)
    out_ref: VMEM (3*C, 128)  f32  rows [3i, 3i+1, 3i+2] = sublane-reduced partial
             (sum(s_i*t_i), sum(s_i*s_i), sum(t_i)) for class i.
    """
    s = s_ref[...].astype(jnp.float32)          # (C, R, 128)
    t = t_ref[...]                              # (R, 128) int32
    n_classes = s.shape[0]

    if fuse_softmax:
        m = jnp.max(s, axis=0, keepdims=True)
        e = jnp.exp(s - m)
        s = e / jnp.sum(e, axis=0, keepdims=True)
        if mask_padding:
            # Padded elements (t == -1) must not contribute to sum(s*s).
            s = jnp.where((t >= 0)[None, :, :], s, 0.0)

    rows = []
    for i in range(n_classes):
        s_i = s[i]                              # (R, 128)
        hit = t == i                            # padding (-1) never matches
        inter = jnp.sum(jnp.where(hit, s_i, 0.0), axis=0, keepdims=True)  # (1,128)
        ssum = jnp.sum(s_i * s_i, axis=0, keepdims=True)
        tsum = jnp.sum(hit.astype(jnp.float32), axis=0, keepdims=True)
        rows += [inter, ssum, tsum]
    out_ref[...] = jnp.concatenate(rows, axis=0)  # (3*C, 128)


def dice_loss(inputs, target, n_classes, weight=None, softmax=False, mask=None):
    """Pallas implementation of DiceLoss.forward (mask path not supported)."""
    # TODO(synk): torch.masked_select (dynamic-shape gather) has no clean Pallas
    # equivalent; `mask` is not implemented.
    assert mask is None

    B, C, H, W = inputs.shape
    assert C == n_classes, "predict & target shape do not match"
    if weight is None:
        weight = [1.0] * n_classes
    weight = jnp.asarray(weight, jnp.float32)
    assert weight.shape[0] == n_classes

    HW = H * W
    rows = pl.cdiv(HW, LANE)

    # Pick a row tile: big enough to hit the HBM roofline, small enough that the
    # double-buffered (C, rows_tile, 128) score tile stays ~<= 4 MiB (fits every
    # generation's default scoped VMEM with room to spare).
    max_tile = max(SUBLANE, (4 * 1024 * 1024) // (2 * C * LANE * 4))
    rows_tile = min(rows, 512, max_tile)
    if rows_tile < rows:
        rows_tile = max(SUBLANE, (rows_tile // SUBLANE) * SUBLANE)
    n_tiles = pl.cdiv(rows, rows_tile)
    padded_rows = n_tiles * rows_tile
    pad = padded_rows * LANE - HW

    # NCHW -> (B, C, HW): pure metadata reshape (no transpose, no copy).
    score = inputs.reshape(B, C, HW)
    tgt = target.reshape(B, HW).astype(jnp.int32)
    if pad:
        # Pad scores with 0 and targets with -1 (matches no class); with fused
        # softmax the padded scores are additionally masked inside the kernel.
        score = jnp.pad(score, ((0, 0), (0, 0), (0, pad)))
        tgt = jnp.pad(tgt, ((0, 0), (0, pad)), constant_values=-1)
    score = score.reshape(B, C, padded_rows, LANE)
    tgt = tgt.reshape(B, padded_rows, LANE)

    kernel = functools.partial(_dice_partials_kernel, bool(softmax), pad > 0)

    partials = pl.pallas_call(
        kernel,
        out_shape=jax.ShapeDtypeStruct((B, n_tiles, 3 * C, LANE), jnp.float32),
        grid=(B, n_tiles),
        in_specs=[
            # All classes of one batch/row-tile per step (target streamed once).
            pl.BlockSpec((None, C, rows_tile, LANE), lambda b, r: (b, 0, r, 0)),
            pl.BlockSpec((None, rows_tile, LANE), lambda b, r: (b, r, 0)),
        ],
        out_specs=pl.BlockSpec((None, None, 3 * C, LANE), lambda b, r: (b, r, 0, 0)),
        compiler_params=pltpu.CompilerParams(
            dimension_semantics=("parallel", "parallel")),
    )(score, tgt)

    # Tiny finalization in plain JAX: reduce partials, dice per class, weighted mean.
    sums = jnp.sum(partials, axis=(0, 1, 3)).reshape(C, 3)
    inter, ssum, tsum = sums[:, 0], sums[:, 1], sums[:, 2]
    smooth = jnp.float32(1e-10)
    dice = jnp.float32(1.0) - inter / (ssum + tsum + smooth)
    return jnp.sum(dice * weight) / jnp.float32(n_classes)


def dice_loss_ref(inputs, target, n_classes, weight=None, softmax=False):
    """Pure-JAX reference mirroring the PyTorch module."""
    if softmax:
        inputs = jax.nn.softmax(inputs, axis=1)
    if weight is None:
        weight = [1.0] * n_classes
    B, C = inputs.shape[0], inputs.shape[1]
    s_flat = inputs.reshape(B, C, -1).astype(jnp.float32)
    t_flat = target.reshape(B, -1)
    loss = 0.0
    smooth = 1e-10
    for i in range(n_classes):
        s = s_flat[:, i]
        t = (t_flat == i).astype(jnp.float32)
        inter = jnp.sum(s * t)
        union = jnp.sum(s * s) + jnp.sum(t * t) + smooth
        loss = loss + (1.0 - inter / union) * weight[i]
    return loss / n_classes


if __name__ == "__main__":
    key = jax.random.PRNGKey(0)
    k1, k2, k3, k4 = jax.random.split(key, 4)

    # Case 1: logits + fused softmax, H*W a multiple of 128 (no padding).
    B, C, H, W = 2, 4, 16, 16
    logits = jax.random.normal(k1, (B, C, H, W), dtype=jnp.float32)
    target = jax.random.randint(k2, (B, 1, H, W), 0, C, dtype=jnp.int32)

    loss = jax.block_until_ready(dice_loss(logits, target, n_classes=C, softmax=True))
    ref = dice_loss_ref(logits, target, n_classes=C, softmax=True)
    assert jnp.allclose(loss, ref, rtol=1e-5, atol=1e-5), (loss, ref)

    # Case 2: probabilities (softmax=False), per-class weights, padded spatial size.
    H2, W2 = 10, 10
    probs = jax.nn.softmax(jax.random.normal(k3, (B, C, H2, W2), jnp.float32), axis=1)
    target2 = jax.random.randint(k4, (B, 1, H2, W2), 0, C, dtype=jnp.int32)
    wts = [0.5, 1.0, 1.5, 2.0]

    loss2 = jax.block_until_ready(
        dice_loss(probs, target2, n_classes=C, weight=wts, softmax=False))
    ref2 = dice_loss_ref(probs, target2, n_classes=C, weight=wts, softmax=False)
    assert jnp.allclose(loss2, ref2, rtol=1e-5, atol=1e-5), (loss2, ref2)

    print("KERNEL_OK")
</pallas_src>

<mosaic_0001>
module attributes {stable_mosaic.version = 11 : i64} {
  func.func @_dice_partials_kernel(%arg0: i32, %arg1: i32, %arg2: memref<1x4x2x128xf32, #tpu.memory_space<vmem>>, %arg3: memref<1x2x128xi32, #tpu.memory_space<vmem>>, %arg4: memref<1x1x12x128xf32, #tpu.memory_space<vmem>>) attributes {dimension_semantics = [#tpu.dimension_semantics<parallel>, #tpu.dimension_semantics<parallel>], iteration_bounds = array<i64: 2, 1>, scalar_prefetch = 0 : i64, scratch_operands = 0 : i64, tpu.core_type = #tpu.core_type<tc>, window_params = [{transform_indices = @transform_0, window_bounds = array<i64: 1, 4, 2, 128>}, {transform_indices = @transform_1, window_bounds = array<i64: 1, 2, 128>}, {transform_indices = @transform_2, window_bounds = array<i64: 1, 1, 12, 128>}]} {
    %c0 = arith.constant 0 : index
    %c0_0 = arith.constant 0 : index
    %c0_1 = arith.constant 0 : index
    %c0_2 = arith.constant 0 : index
    %0 = vector.load %arg2[%c0, %c0_0, %c0_1, %c0_2] : memref<1x4x2x128xf32, #tpu.memory_space<vmem>>, vector<1x4x2x128xf32>
    %1 = vector.shape_cast %0 : vector<1x4x2x128xf32> to vector<4x2x128xf32>
    %c0_3 = arith.constant 0 : index
    %c0_4 = arith.constant 0 : index
    %c0_5 = arith.constant 0 : index
    %2 = vector.load %arg3[%c0_3, %c0_4, %c0_5] : memref<1x2x128xi32, #tpu.memory_space<vmem>>, vector<1x2x128xi32>
    %3 = vector.shape_cast %2 : vector<1x2x128xi32> to vector<2x128xi32>
    %cst = arith.constant dense<0xFF800000> : vector<2x128xf32>
    %4 = vector.multi_reduction <maximumf>, %1, %cst [0] : vector<4x2x128xf32> to vector<2x128xf32>
    %5 = vector.shape_cast %4 : vector<2x128xf32> to vector<1x2x128xf32>
    %6 = vector.broadcast %5 : vector<1x2x128xf32> to vector<4x2x128xf32>
    %7 = arith.subf %1, %6 : vector<4x2x128xf32>
    %8 = math.exp %7 : vector<4x2x128xf32>
    %cst_6 = arith.constant dense<0.000000e+00> : vector<2x128xf32>
    %9 = vector.multi_reduction <add>, %8, %cst_6 [0] : vector<4x2x128xf32> to vector<2x128xf32>
    %10 = vector.shape_cast %9 : vector<2x128xf32> to vector<1x2x128xf32>
    %11 = vector.broadcast %10 : vector<1x2x128xf32> to vector<4x2x128xf32>
    %12 = arith.divf %8, %11 : vector<4x2x128xf32>
    %13 = vector.extract_strided_slice %12 {offsets = [0, 0, 0], sizes = [1, 2, 128], strides = [1, 1, 1]} : vector<4x2x128xf32> to vector<1x2x128xf32>
    %14 = vector.shape_cast %13 : vector<1x2x128xf32> to vector<2x128xf32>
    %c0_i32 = arith.constant 0 : i32
    %15 = vector.broadcast %c0_i32 : i32 to vector<2x128xi32>
    %16 = arith.cmpi eq, %3, %15 : vector<2x128xi32>
    %cst_7 = arith.constant 0.000000e+00 : f32
    %17 = vector.broadcast %cst_7 : f32 to vector<2x128xf32>
    %18 = arith.select %16, %14, %17 : vector<2x128xi1>, vector<2x128xf32>
    %cst_8 = arith.constant dense<0.000000e+00> : vector<128xf32>
    %19 = vector.multi_reduction <add>, %18, %cst_8 [0] : vector<2x128xf32> to vector<128xf32>
    %20 = vector.shape_cast %19 : vector<128xf32> to vector<1x128xf32>
    %21 = arith.mulf %14, %14 : vector<2x128xf32>
    %cst_9 = arith.constant dense<0.000000e+00> : vector<128xf32>
    %22 = vector.multi_reduction <add>, %21, %cst_9 [0] : vector<2x128xf32> to vector<128xf32>
    %23 = vector.shape_cast %22 : vector<128xf32> to vector<1x128xf32>
    %24 = arith.extui %16 : vector<2x128xi1> to vector<2x128xi32>
    %25 = arith.sitofp %24 : vector<2x128xi32> to vector<2x128xf32>
    %cst_10 = arith.constant dense<0.000000e+00> : vector<128xf32>
    %26 = vector.multi_reduction <add>, %25, %cst_10 [0] : vector<2x128xf32> to vector<128xf32>
    %27 = vector.shape_cast %26 : vector<128xf32> to vector<1x128xf32>
    %28 = vector.extract_strided_slice %12 {offsets = [1, 0, 0], sizes = [1, 2, 128], strides = [1, 1, 1]} : vector<4x2x128xf32> to vector<1x2x128xf32>
    %29 = vector.shape_cast %28 : vector<1x2x128xf32> to vector<2x128xf32>
    %c1_i32 = arith.constant 1 : i32
    %30 = vector.broadcast %c1_i32 : i32 to vector<2x128xi32>
    %31 = arith.cmpi eq, %3, %30 : vector<2x128xi32>
    %cst_11 = arith.constant 0.000000e+00 : f32
    %32 = vector.broadcast %cst_11 : f32 to vector<2x128xf32>
    %33 = arith.select %31, %29, %32 : vector<2x128xi1>, vector<2x128xf32>
    %cst_12 = arith.constant dense<0.000000e+00> : vector<128xf32>
    %34 = vector.multi_reduction <add>, %33, %cst_12 [0] : vector<2x128xf32> to vector<128xf32>
    %35 = vector.shape_cast %34 : vector<128xf32> to vector<1x128xf32>
    %36 = arith.mulf %29, %29 : vector<2x128xf32>
    %cst_13 = arith.constant dense<0.000000e+00> : vector<128xf32>
    %37 = vector.multi_reduction <add>, %36, %cst_13 [0] : vector<2x128xf32> to vector<128xf32>
    %38 = vector.shape_cast %37 : vector<128xf32> to vector<1x128xf32>
    %39 = arith.extui %31 : vector<2x128xi1> to vector<2x128xi32>
    %40 = arith.sitofp %39 : vector<2x128xi32> to vector<2x128xf32>
    %cst_14 = arith.constant dense<0.000000e+00> : vector<128xf32>
    %41 = vector.multi_reduction <add>, %40, %cst_14 [0] : vector<2x128xf32> to vector<128xf32>
    %42 = vector.shape_cast %41 : vector<128xf32> to vector<1x128xf32>
    %43 = vector.extract_strided_slice %12 {offsets = [2, 0, 0], sizes = [1, 2, 128], strides = [1, 1, 1]} : vector<4x2x128xf32> to vector<1x2x128xf32>
    %44 = vector.shape_cast %43 : vector<1x2x128xf32> to vector<2x128xf32>
    %c2_i32 = arith.constant 2 : i32
    %45 = vector.broadcast %c2_i32 : i32 to vector<2x128xi32>
    %46 = arith.cmpi eq, %3, %45 : vector<2x128xi32>
    %cst_15 = arith.constant 0.000000e+00 : f32
    %47 = vector.broadcast %cst_15 : f32 to vector<2x128xf32>
    %48 = arith.select %46, %44, %47 : vector<2x128xi1>, vector<2x128xf32>
    %cst_16 = arith.constant dense<0.000000e+00> : vector<128xf32>
    %49 = vector.multi_reduction <add>, %48, %cst_16 [0] : vector<2x128xf32> to vector<128xf32>
    %50 = vector.shape_cast %49 : vector<128xf32> to vector<1x128xf32>
    %51 = arith.mulf %44, %44 : vector<2x128xf32>
    %cst_17 = arith.constant dense<0.000000e+00> : vector<128xf32>
    %52 = vector.multi_reduction <add>, %51, %cst_17 [0] : vector<2x128xf32> to vector<128xf32>
    %53 = vector.shape_cast %52 : vector<128xf32> to vector<1x128xf32>
    %54 = arith.extui %46 : vector<2x128xi1> to vector<2x128xi32>
    %55 = arith.sitofp %54 : vector<2x128xi32> to vector<2x128xf32>
    %cst_18 = arith.constant dense<0.000000e+00> : vector<128xf32>
    %56 = vector.multi_reduction <add>, %55, %cst_18 [0] : vector<2x128xf32> to vector<128xf32>
    %57 = vector.shape_cast %56 : vector<128xf32> to vector<1x128xf32>
    %58 = vector.extract_strided_slice %12 {offsets = [3, 0, 0], sizes = [1, 2, 128], strides = [1, 1, 1]} : vector<4x2x128xf32> to vector<1x2x128xf32>
    %59 = vector.shape_cast %58 : vector<1x2x128xf32> to vector<2x128xf32>
    %c3_i32 = arith.constant 3 : i32
    %60 = vector.broadcast %c3_i32 : i32 to vector<2x128xi32>
    %61 = arith.cmpi eq, %3, %60 : vector<2x128xi32>
    %cst_19 = arith.constant 0.000000e+00 : f32
    %62 = vector.broadcast %cst_19 : f32 to vector<2x128xf32>
    %63 = arith.select %61, %59, %62 : vector<2x128xi1>, vector<2x128xf32>
    %cst_20 = arith.constant dense<0.000000e+00> : vector<128xf32>
    %64 = vector.multi_reduction <add>, %63, %cst_20 [0] : vector<2x128xf32> to vector<128xf32>
    %65 = vector.shape_cast %64 : vector<128xf32> to vector<1x128xf32>
    %66 = arith.mulf %59, %59 : vector<2x128xf32>
    %cst_21 = arith.constant dense<0.000000e+00> : vector<128xf32>
    %67 = vector.multi_reduction <add>, %66, %cst_21 [0] : vector<2x128xf32> to vector<128xf32>
    %68 = vector.shape_cast %67 : vector<128xf32> to vector<1x128xf32>
    %69 = arith.extui %61 : vector<2x128xi1> to vector<2x128xi32>
    %70 = arith.sitofp %69 : vector<2x128xi32> to vector<2x128xf32>
    %cst_22 = arith.constant dense<0.000000e+00> : vector<128xf32>
    %71 = vector.multi_reduction <add>, %70, %cst_22 [0] : vector<2x128xf32> to vector<128xf32>
    %72 = vector.shape_cast %71 : vector<128xf32> to vector<1x128xf32>
    %73 = tpu.concatenate %20, %23, %27, %35, %38, %42, %50, %53, %57, %65, %68, %72 in 0 : vector<1x128xf32>, vector<1x128xf32>, vector<1x128xf32>, vector<1x128xf32>, vector<1x128xf32>, vector<1x128xf32>, vector<1x128xf32>, vector<1x128xf32>, vector<1x128xf32>, vector<1x128xf32>, vector<1x128xf32>, vector<1x128xf32> -> vector<12x128xf32>
    %c0_23 = arith.constant 0 : index
    %c0_24 = arith.constant 0 : index
    %c0_25 = arith.constant 0 : index
    %c0_26 = arith.constant 0 : index
    %74 = vector.load %arg4[%c0_23, %c0_24, %c0_25, %c0_26] : memref<1x1x12x128xf32, #tpu.memory_space<vmem>>, vector<1x1x12x128xf32>
    %75 = vector.shape_cast %74 : vector<1x1x12x128xf32> to vector<12x128xf32>
    %76 = vector.shape_cast %73 : vector<12x128xf32> to vector<1x1x12x128xf32>
    tpu.vector_store %arg4[%c0_23, %c0_24, %c0_25, %c0_26], %76 {strides = array<i32>} : memref<1x1x12x128xf32, #tpu.memory_space<vmem>>, vector<1x1x12x128xf32>,
    return
  }
  func.func @transform_0(%arg0: i32, %arg1: i32) -> (i32, i32, i32, i32) {
    %c0_i32 = arith.constant 0 : i32
    %c0_i32_0 = arith.constant 0 : i32
    %c0_i32_1 = arith.constant 0 : i32
    return %arg0, %c0_i32, %arg1, %c0_i32_0 : i32, i32, i32, i32
  }
  func.func @transform_1(%arg0: i32, %arg1: i32) -> (i32, i32, i32) {
    %c0_i32 = arith.constant 0 : i32
    %c0_i32_0 = arith.constant 0 : i32
    return %arg0, %arg1, %c0_i32 : i32, i32, i32
  }
  func.func @transform_2(%arg0: i32, %arg1: i32) -> (i32, i32, i32, i32) {
    %c0_i32 = arith.constant 0 : i32
    %c0_i32_0 = arith.constant 0 : i32
    %c0_i32_1 = arith.constant 0 : i32
    return %arg0, %arg1, %c0_i32, %c0_i32_0 : i32, i32, i32, i32
  }
}

</mosaic_0001>

<llo_original>
// kernel: tpu_custom_call.1
$region0: #{tpu_custom_call.1}
  #allocation0 [shape = 'u32[]', space=smem, size = 0x4, offset = 0x4, fixed_abs, tag = 'smem constant byte address 0x4 - core index']
  #allocation1 [shape = 'u32[144,128]{1,0:T(1,128)}', space=vmem, size = 0x12000, scoped, tag = 'internal scratch']
  %s0 = inlined_call_operand.hbm [shape: f32[2,4,2,128], index: 0, kind: input, shape index: {}]
  %s1 = inlined_call_operand.hbm [shape: s32[2,2,128], index: 1, kind: input, shape index: {}]
  %s2 = inlined_call_operand.vmem [shape: f32[2,1,12,128], index: 2, kind: output, shape index: {}]
  %s3 = sld [smem:[#allocation0]]
  $region49: #{tpu_custom_call.1} parent=0
    _
  %s5 = ssub.s32 1, %s3
  %s6 = scalar_select 0, %s5, %s3
  $region1: #{tpu_custom_call.1} parent=0
    #allocation2 [shape = 'u8[8192]{0}', space=vmem, size = 0x2000, scoped, tag = 'input window, operand 0']
    #allocation3 [shape = 's32[2]{0}', space=sflag, size = 0x8, scoped, tag = 'scoped memory for tpu_custom_call.1']
    #allocation4 [shape = 'u8[2048]{0}', space=vmem, size = 0x800, scoped, tag = 'input window, operand 1']
    #allocation5 [shape = 's32[2]{0}', space=sflag, size = 0x8, scoped, tag = 'scoped memory for tpu_custom_call.1']
    %7 = vsyncpa [#allocation3], 0
    %s8 = scalar_lea.sflag [#allocation3], 1
    %9 = vsyncpa %s8, 0
    %10 = vsyncpa [#allocation5], 0
    %s11 = scalar_lea.sflag [#allocation5], 1
    %12 = vsyncpa %s11, 0
    loop: start=0, step=1, limit=4
    $region2: #{tpu_custom_call.1} parent=1 // loop_pre_header
      _
    $region3: #{tpu_custom_call.1} parent=1 // loop_header
      %s14 = sphi 0, %s18
      %p15 = scmp.ge.s32.totalorder %s14, 4
      %s21 = sphi 0, %s33
      %s22 = sphi 0, %s29
      %s23 = sphi 0, %s21
      %s24 = sphi 0, %s22
      %s25 = sphi 0, %s23
      %s26 = sphi 0, %s24
      %s38 = sphi 0, %s40
      %s41 = sphi 0, %s38
      %s42 = sphi 0, %s41
      %s58 = sphi 0, %s42
      %s66 = sphi 0, %s68
      %s69 = sphi 0, %s66
      %s70 = sphi 0, %s69
      %s86 = sphi 0, %s70
      %s94 = sphi 0, %s96
      %s97 = sphi 0, %s94
      %s98 = sphi 0, %s97
      %s114 = sphi 0, %s98
    $region4: #{tpu_custom_call.1} parent=1 // loop_header_branch
      %17 = sbr.rel (%p15) target = $region8
    $region5: #{tpu_custom_call.1} parent=1 // loop_body
      %s19 = ssub.s32 %s14, 1
      %s20 = ssub.s32 %s14, 2
      %s27 = sadd.s32 1, %s22
      %p28 = scmp.ge.s32.totalorder %s27, 1
      %s29 = scalar_select %p28, 0, %s27
      %s30 = sadd.s32 1, %s21
      %s31 = scalar_select %p28, %s30, %s21
      %p32 = scmp.ge.s32.totalorder %s31, 2
      %s33 = scalar_select %p32, 0, %s31
      %s34 = ssub.s32 %s21, %s33
      %s35 = ssub.s32 %s22, %s29
      %s36 = sor.u32 %s34, %s35
      %p37 = scmp.eq.s32.totalorder %s36, 0
      %s39 = sadd.s32 %s38, 1
      %s40 = scalar_select %p37, %s38, %s39
      %p43 = pneg %p37
      %p44 = scmp.eq.s32.totalorder %s14, 1
      %p45 = por %p43, %p44
      %p46 = scmp.ne.s32.totalorder %s38, %s41
      %p47 = scmp.eq.s32.totalorder %s14, 0
      %p48 = por %p46, %p47
      %p49 = scmp.ne.s32.totalorder %s38, %s41
      %p50 = scmp.eq.s32.totalorder %s19, 1
      %p51 = por %p49, %p50
      %p52 = scmp.ne.s32.totalorder %s41, %s42
      %p53 = scmp.eq.s32.totalorder %s19, 0
      %p54 = por %p52, %p53
      %p55 = scmp.ne.s32.totalorder %s41, %s42
      %p56 = scmp.eq.s32.totalorder %s20, 1
      %p57 = por %p55, %p56
      %p59 = scmp.ne.s32.totalorder %s42, %s58
      %p60 = scmp.eq.s32.totalorder %s20, 0
      %p61 = por %p59, %p60
      %s62 = ssub.s32 %s21, %s33
      %s63 = ssub.s32 %s22, %s29
      %s64 = sor.u32 %s62, %s63
      %p65 = scmp.eq.s32.totalorder %s64, 0
      %s67 = sadd.s32 %s66, 1
      %s68 = scalar_select %p65, %s66, %s67
      %p71 = pneg %p65
      %p72 = scmp.eq.s32.totalorder %s14, 1
      %p73 = por %p71, %p72
      %p74 = scmp.ne.s32.totalorder %s66, %s69
      %p75 = scmp.eq.s32.totalorder %s14, 0
      %p76 = por %p74, %p75
      %p77 = scmp.ne.s32.totalorder %s66, %s69
      %p78 = scmp.eq.s32.totalorder %s19, 1
      %p79 = por %p77, %p78
      %p80 = scmp.ne.s32.totalorder %s69, %s70
      %p81 = scmp.eq.s32.totalorder %s19, 0
      %p82 = por %p80, %p81
      %p83 = scmp.ne.s32.totalorder %s69, %s70
      %p84 = scmp.eq.s32.totalorder %s20, 1
      %p85 = por %p83, %p84
      %p87 = scmp.ne.s32.totalorder %s70, %s86
      %p88 = scmp.eq.s32.totalorder %s20, 0
      %p89 = por %p87, %p88
      %s90 = ssub.s32 %s21, %s33
      %s91 = ssub.s32 %s22, %s29
      %s92 = sor.u32 %s90, %s91
      %p93 = scmp.eq.s32.totalorder %s92, 0
      %s95 = sadd.s32 %s94, 1
      %s96 = scalar_select %p93, %s94, %s95
      %p99 = pneg %p93
      %p100 = scmp.eq.s32.totalorder %s14, 1
      %p101 = por %p99, %p100
      %p102 = scmp.ne.s32.totalorder %s94, %s97
      %p103 = scmp.eq.s32.totalorder %s14, 0
      %p104 = por %p102, %p103
      %p105 = scmp.ne.s32.totalorder %s94, %s97
      %p106 = scmp.eq.s32.totalorder %s19, 1
      %p107 = por %p105, %p106
      %p108 = scmp.ne.s32.totalorder %s97, %s98
      %p109 = scmp.eq.s32.totalorder %s19, 0
      %p110 = por %p108, %p109
      %p111 = scmp.ne.s32.totalorder %s97, %s98
      %p112 = scmp.eq.s32.totalorder %s20, 1
      %p113 = por %p111, %p112
      %p115 = scmp.ne.s32.totalorder %s98, %s114
      %p116 = scmp.eq.s32.totalorder %s20, 0
      %p117 = por %p115, %p116
      %p118 = scmp.le.s32.totalorder 1, %s14
      %p119 = scmp.lt.s32.totalorder %s14, 3
      %p120 = pnand %p118, %p119
      %p121 = pneg %p120
      // Predicated region
      $region9: #{tpu_custom_call.1} parent=5 // pred_check
        _
      $region10: #{tpu_custom_call.1} parent=5 // pred_check_branch
        %123 = sbr.rel (%p120) target = $region12
      $region11: #{tpu_custom_call.1} parent=5 // pred_region
        %s124 = ssub.s32 %s14, 1
      $region12: #{tpu_custom_call.1} parent=5 // pred_fallthru
        _
      %p125 = scmp.lt.s32.totalorder %s14, 2
      // Predicated region
      $region13: #{tpu_custom_call.1} parent=5 // pred_check
        %p126 = pneg %p125
      $region14: #{tpu_custom_call.1} parent=5 // pred_check_branch
        %128 = sbr.rel (%p126) target = $region16
      $region15: #{tpu_custom_call.1} parent=5 // pred_region
        // Predicated region
        $region17: #{tpu_custom_call.1} parent=15 // pred_check
          %p129 = pneg %p48
        $region18: #{tpu_custom_call.1} parent=15 // pred_check_branch
          %131 = sbr.rel (%p129) target = $region20
        $region19: #{tpu_custom_call.1} parent=15 // pred_region
          %s132 = sand.u32 %s38, 1
          %s133 = scalar_lea.sflag [#allocation3], %s132
          %s134 = sand.u32 %s38, 1
          %s135 = smul.addr %s134, 8
          %s136 = scalar_lea.vmem [#allocation2], %s135
          %s138 = ssub.s32 128, 128
          %139 = vsyncadd %s133, %s138
          %s140 = smul.addr %s21, 4
          %s141 = sadd.s32 %s22, %s140
          %s142 = smul.addr %s141, 32
          %s143 = scalar_lea.hbm %s0, %s142
          %s144 = sshll.u32 %s136, 4
          %s145 = int_to_ptr.vmem [resolvable:$true] %s144
          %150 = dma.hbm_to_vmem [thread:$0]  %s143, 128, %s145, %s133, 32, 32, 2
        $region20: #{tpu_custom_call.1} parent=15 // pred_fallthru
          _
        // Predicated region
        $region21: #{tpu_custom_call.1} parent=15 // pred_check
          %p151 = pneg %p76
        $region22: #{tpu_custom_call.1} parent=15 // pred_check_branch
          %153 = sbr.rel (%p151) target = $region24
        $region23: #{tpu_custom_call.1} parent=15 // pred_region
          %s154 = sand.u32 %s66, 1
          %s155 = scalar_lea.sflag [#allocation5], %s154
          %s156 = sand.u32 %s66, 1
          %s157 = smul.addr %s156, 2
          %s158 = scalar_lea.vmem [#allocation4], %s157
          %s160 = ssub.s32 32, 32
          %161 = vsyncadd %s155, %s160
          %s162 = sadd.s32 %s22, %s21
          %s163 = smul.addr %s162, 32
          %s164 = scalar_lea.hbm %s1, %s163
          %s166 = sshll.u32 %s158, 4
          %s167 = int_to_ptr.vmem [resolvable:$true] %s166
          %169 = dma.hbm_to_vmem [thread:$0]  %s164, 32, %s167, %s155
        $region24: #{tpu_custom_call.1} parent=15 // pred_fallthru
          _
      $region16: #{tpu_custom_call.1} parent=5 // pred_fallthru
        _
      %p170 = scmp.le.s32.totalorder 1, %s14
      %p171 = scmp.lt.s32.totalorder %s14, 3
      %p172 = pnand %p170, %p171
      %p173 = pneg %p172
      // Predicated region
      $region25: #{tpu_custom_call.1} parent=5 // pred_check
        _
      $region26: #{tpu_custom_call.1} parent=5 // pred_check_branch
        %175 = sbr.rel (%p172) target = $region28
      $region27: #{tpu_custom_call.1} parent=5 // pred_region
        %s176 = ssub.s32 %s14, 1
        %s177 = sand.u32 %s41, 1
        %s178 = scalar_lea.sflag [#allocation3], %s177
        %s179 = sand.u32 %s41, 1
        %s180 = smul.addr %s179, 8
        %s181 = scalar_lea.vmem [#allocation2], %s180
        // Predicated region
        $region29: #{tpu_custom_call.1} parent=27 // pred_check
          %p182 = pneg %p54
        $region30: #{tpu_custom_call.1} parent=27 // pred_check_branch
          %184 = sbr.rel (%p182) target = $region32
        $region31: #{tpu_custom_call.1} parent=27 // pred_region
          %185 = dma.done %s178, 128
        $region32: #{tpu_custom_call.1} parent=27 // pred_fallthru
          _
        %s186 = sand.u32 %s69, 1
        %s187 = scalar_lea.sflag [#allocation5], %s186
        %s188 = sand.u32 %s69, 1
        %s189 = smul.addr %s188, 2
        %s190 = scalar_lea.vmem [#allocation4], %s189
        // Predicated region
        $region33: #{tpu_custom_call.1} parent=27 // pred_check
          %p191 = pneg %p82
        $region34: #{tpu_custom_call.1} parent=27 // pred_check_branch
          %193 = sbr.rel (%p191) target = $region36
        $region35: #{tpu_custom_call.1} parent=27 // pred_region
          %194 = dma.done %s187, 32
        $region36: #{tpu_custom_call.1} parent=27 // pred_fallthru
          _
        %s195 = sand.u32 %s41, 1
        %s196 = scalar_lea.sflag [#allocation3], %s195
        %s197 = sand.u32 %s41, 1
        %s198 = smul.addr %s197, 8
        %s199 = scalar_lea.vmem [#allocation2], %s198
        %p200 = pneg %p54
        %p201 = pneg %p51
        %s202 = sand.u32 %s69, 1
        %s203 = scalar_lea.sflag [#allocation5], %s202
        %s204 = sand.u32 %s69, 1
        %s205 = smul.addr %s204, 2
        %s206 = scalar_lea.vmem [#allocation4], %s205
        %p207 = pneg %p82
        %p208 = pneg %p79
        %p209 = pneg %p110
        %p210 = pneg %p107
        %p211 = scmp.lt.s32.totalorder %s23, 1
        %s212 = scalar_select %p211, %s23, 1
        %p213 = scmp.lt.s32.totalorder %s24, 0
        %s214 = scalar_select %p213, %s24, 0
        %s215 = smul.addr %s214, 2
        %s216 = smul.addr %s212, 2
        %s217 = sadd.s32 %s215, %s216
        %s218 = smul.addr %s217, 8
        %s219 = scalar_lea.vmem %s2, %s218
        %p220 = scmp.lt.s32.totalorder %s23, 1
        %s221 = scalar_select %p220, %s23, 1
        %p222 = scmp.lt.s32.totalorder %s24, 0
        %s223 = scalar_select %p222, %s24, 0
        %s224 = smul.addr %s223, 2
        %s225 = smul.addr %s221, 2
        %s226 = sadd.s32 %s224, %s225
        %s227 = smul.addr %s226, 8
        %s228 = scalar_lea.vmem %s2, %s227
        %v229 = vld [vmem:[%s181] sm:$0x3]
        %v230 = vld [vmem:[%s181 + $0x2] sm:$0x3]
        %v231 = vld [vmem:[%s181 + $0x4] sm:$0x3]
        %v232 = vld [vmem:[%s181 + $0x6] sm:$0x3]
        %v233 = vld [vmem:[%s190] sm:$0x3]
        %vm234 = vcmask 1041408
        %v235 = vsel %vm234, %v229, -inf
        %v236 = vsel %vm234, %v230, -inf
        %v237 = vsel %vm234, %v231, -inf
        %v238 = vsel %vm234, %v232, -inf
        %v239 = vmax.f32 %v235, %v236
        %v240 = vmax.f32 %v237, %v238
        %v241 = vmax.f32 %v239, %v240
        %v242 = vsub.f32 %v229, %v241
        %v243 = vsub.f32 %v230, %v241
        %v244 = vsub.f32 %v231, %v241
        %v245 = vsub.f32 %v232, %v241
        %v246 = vmul.f32 %v242, 1.442695
        %v247 = vpow.pop %v246
        %v248 = vmul.f32 %v243, 1.442695
        %v249 = vpow.pop %v248
        %v250 = vmul.f32 %v244, 1.442695
        %v251 = vpow.pop %v250
        %v252 = vmul.f32 %v245, 1.442695
        %v253 = vpow.pop %v252
        %v254 = vsel %vm234, %v247, 0.0
        %v255 = vsel %vm234, %v249, 0.0
        %v256 = vadd.f32 %v254, %v255
        %v257 = vsel %vm234, %v251, 0.0
        %v258 = vadd.f32 %v256, %v257
        %v259 = vsel %vm234, %v253, 0.0
        %v260 = vadd.f32 %v258, %v259
        %v261 = vrcp.pop %v260
        %v262 = vmul.f32 %v247, %v261
        %v263 = vmul.f32 %v249, %v261
        %v264 = vmul.f32 %v251, %v261
        %v265 = vmul.f32 %v253, %v261
        %vm266 = vcmp.eq.s32.totalorder %v233, 0
        %v267 = vsel %vm266, %v262, 0.0
        %v268 = vsel %vm234, %v267, 0.0
        %v269 = vrot.slane %v268, 4
        %v270 = vadd.f32 %v268, %v269
        %v271 = vrot.slane %v270, 2
        %v272 = vadd.f32 %v270, %v271
        %v273 = vrot.slane %v272, 1
        %v274 = vadd.f32 %v272, %v273
        %v275 = vmul.f32 %v262, %v262
        %v276 = vsel %vm234, %v275, 0.0
        %v277 = vrot.slane %v276, 4
        %v278 = vadd.f32 %v276, %v277
        %v279 = vrot.slane %v278, 2
        %v280 = vadd.f32 %v278, %v279
        %v281 = vrot.slane %v280, 1
        %v282 = vadd.f32 %v280, %v281
        %v283 = vsel %vm266, 1, 0
        %v284 = vcvt.s32.f32 %v283
        %v285 = vsel %vm234, %v284, 0.0
        %v286 = vrot.slane %v285, 4
        %v287 = vadd.f32 %v285, %v286
        %v288 = vrot.slane %v287, 2
        %v289 = vadd.f32 %v287, %v288
        %v290 = vrot.slane %v289, 1
        %v291 = vadd.f32 %v289, %v290
        %vm292 = vcmp.eq.s32.totalorder %v233, 1
        %v293 = vsel %vm292, %v263, 0.0
        %v294 = vsel %vm234, %v293, 0.0
        %v295 = vrot.slane %v294, 4
        %v296 = vadd.f32 %v294, %v295
        %v297 = vrot.slane %v296, 2
        %v298 = vadd.f32 %v296, %v297
        %v299 = vrot.slane %v298, 1
        %v300 = vadd.f32 %v298, %v299
        %v301 = vmul.f32 %v263, %v263
        %v302 = vsel %vm234, %v301, 0.0
        %v303 = vrot.slane %v302, 4
        %v304 = vadd.f32 %v302, %v303
        %v305 = vrot.slane %v304, 2
        %v306 = vadd.f32 %v304, %v305
        %v307 = vrot.slane %v306, 1
        %v308 = vadd.f32 %v306, %v307
        %v309 = vsel %vm292, 1, 0
        %v310 = vcvt.s32.f32 %v309
        %v311 = vsel %vm234, %v310, 0.0
        %v312 = vrot.slane %v311, 4
        %v313 = vadd.f32 %v311, %v312
        %v314 = vrot.slane %v313, 2
        %v315 = vadd.f32 %v313, %v314
        %v316 = vrot.slane %v315, 1
        %v317 = vadd.f32 %v315, %v316
        %vm318 = vcmp.eq.s32.totalorder %v233, 2
        %v319 = vsel %vm318, %v264, 0.0
        %v320 = vsel %vm234, %v319, 0.0
        %v321 = vrot.slane %v320, 4
        %v322 = vadd.f32 %v320, %v321
        %v323 = vrot.slane %v322, 2
        %v324 = vadd.f32 %v322, %v323
        %v325 = vrot.slane %v324, 1
        %v326 = vadd.f32 %v324, %v325
        %v327 = vmul.f32 %v264, %v264
        %v328 = vsel %vm234, %v327, 0.0
        %v329 = vrot.slane %v328, 4
        %v330 = vadd.f32 %v328, %v329
        %v331 = vrot.slane %v330, 2
        %v332 = vadd.f32 %v330, %v331
        %v333 = vrot.slane %v332, 1
        %v334 = vadd.f32 %v332, %v333
        %v335 = vsel %vm318, 1, 0
        %v336 = vcvt.s32.f32 %v335
        %v337 = vsel %vm234, %v336, 0.0
        %v338 = vrot.slane %v337, 4
        %v339 = vadd.f32 %v337, %v338
        %v340 = vrot.slane %v339, 2
        %v341 = vadd.f32 %v339, %v340
        %v342 = vrot.slane %v341, 1
        %v343 = vadd.f32 %v341, %v342
        %vm344 = vcmp.eq.s32.totalorder %v233, 3
        %v345 = vsel %vm344, %v265, 0.0
        %v346 = vsel %vm234, %v345, 0.0
        %v347 = vrot.slane %v346, 4
        %v348 = vadd.f32 %v346, %v347
        %v349 = vrot.slane %v348, 2
        %v350 = vadd.f32 %v348, %v349
        %v351 = vrot.slane %v350, 1
        %v352 = vadd.f32 %v350, %v351
        %v353 = vmul.f32 %v265, %v265
        %v354 = vsel %vm234, %v353, 0.0
        %v355 = vrot.slane %v354, 4
        %v356 = vadd.f32 %v354, %v355
        %v357 = vrot.slane %v356, 2
        %v358 = vadd.f32 %v356, %v357
        %v359 = vrot.slane %v358, 1
        %v360 = vadd.f32 %v358, %v359
        %v361 = vsel %vm344, 1, 0
        %v362 = vcvt.s32.f32 %v361
        %v363 = vsel %vm234, %v362, 0.0
        %v364 = vrot.slane %v363, 4
        %v365 = vadd.f32 %v363, %v364
        %v366 = vrot.slane %v365, 2
        %v367 = vadd.f32 %v365, %v366
        %v368 = vrot.slane %v367, 1
        %v369 = vadd.f32 %v367, %v368
        %vm370 = vcmask 1040384
        %v371 = vsel %vm370, %v274, %v282
        %v372 = vsel %vm234, %v371, %v291
        %vm373 = vcmask 1042432
        %v374 = vsel %vm373, %v372, %v300
        %vm375 = vcmask 1043456
        %v376 = vsel %vm375, %v374, %v308
        %vm377 = vcmask 1044480
        %v378 = vsel %vm377, %v376, %v317
        %vm379 = vcmask 1045504
        %v380 = vsel %vm379, %v378, %v326
        %vm381 = vcmask 1046528
        %v382 = vsel %vm381, %v380, %v334
        %v383 = vsel %vm370, %v343, %v352
        %v384 = vsel %vm234, %v383, %v360
        %v385 = vsel %vm373, %v384, %v369
        %386 = vst [vmem:[%s228] sm:$0xff] %v382
        %387 = vst [vmem:[%s228 + $0x8] sm:$0xf] %v385
        %p388 = scmp.lt.s32.totalorder %s23, 1
        %s389 = scalar_select %p388, %s23, 1
        %p390 = scmp.lt.s32.totalorder %s24, 0
        %s391 = scalar_select %p390, %s24, 0
        %s392 = smul.addr %s391, 2
        %s393 = smul.addr %s389, 2
        %s394 = sadd.s32 %s392, %s393
        %s395 = smul.addr %s394, 8
        %s396 = scalar_lea.vmem %s2, %s395
        // Predicated region
        $region37: #{tpu_custom_call.1} parent=27 // pred_check
          %p397 = pneg %p107
        $region38: #{tpu_custom_call.1} parent=27 // pred_check_branch
          %399 = sbr.rel (%p397) target = $region40
        $region39: #{tpu_custom_call.1} parent=27 // pred_region
          _
        $region40: #{tpu_custom_call.1} parent=27 // pred_fallthru
          _
      $region28: #{tpu_custom_call.1} parent=5 // pred_fallthru
        _
      %p400 = scmp.le.s32.totalorder 2, %s14
      // Predicated region
      $region41: #{tpu_custom_call.1} parent=5 // pred_check
        %p401 = pneg %p400
      $region42: #{tpu_custom_call.1} parent=5 // pred_check_branch
        %403 = sbr.rel (%p401) target = $region44
      $region43: #{tpu_custom_call.1} parent=5 // pred_region
        %s404 = ssub.s32 %s14, 2
        // Predicated region
        $region45: #{tpu_custom_call.1} parent=43 // pred_check
          %p405 = pneg %p113
        $region46: #{tpu_custom_call.1} parent=43 // pred_check_branch
          %407 = sbr.rel (%p405) target = $region48
        $region47: #{tpu_custom_call.1} parent=43 // pred_region
          %p408 = scmp.lt.s32.totalorder %s25, 1
          %s409 = scalar_select %p408, %s25, 1
          %p410 = scmp.lt.s32.totalorder %s26, 0
          %s411 = scalar_select %p410, %s26, 0
          %s412 = smul.addr %s411, 2
          %s413 = smul.addr %s409, 2
          %s414 = sadd.s32 %s412, %s413
          %s415 = smul.addr %s414, 8
          %s416 = scalar_lea.vmem %s2, %s415
        $region48: #{tpu_custom_call.1} parent=43 // pred_fallthru
          _
      $region44: #{tpu_custom_call.1} parent=5 // pred_fallthru
        _
    $region6: #{tpu_custom_call.1} parent=1 // loop_footer
      %s18 = sadd.s32 1, %s14
    $region7: #{tpu_custom_call.1} parent=1 // loop_footer_branch
      %13 = sbr.rel target = $region3
    $region8: #{tpu_custom_call.1} parent=1 // loop_exit
      _
    %417 = vsyncpa [#allocation3], 1
    %s418 = scalar_lea.sflag [#allocation3], 1
    %419 = vsyncpa %s418, 1
    %420 = vsyncpa [#allocation5], 1
    %s421 = scalar_lea.sflag [#allocation5], 1
    %422 = vsyncpa %s421, 1

</llo_original>
